<compile_context>
chip_gen: v7x
topology: tpu7x:2x2x1
jax: 0.10.0
libtpu: 0.0.40
codegen_flags: <defaults>
</compile_context>

<pallas_src>
from functools import partial

import jax
import jax.numpy as jnp
from jax.experimental import pallas as pl
from jax.experimental.pallas import tpu as pltpu


def _round_up(a, b):
    return (a + b - 1) // b * b


def fcnn_kernel(x_ref, w1_ref, b1_ref, w2_ref, b2_ref, o_ref):
    # x_ref:  (TILE_M, D_in)   VMEM, bf16 (row tile)
    # w1_ref: (D_in, H)        VMEM, bf16 (resident; already transposed from (H, D_in))
    # b1_ref: (1, H)           VMEM, f32  (resident)
    # w2_ref: (H, D_out)       VMEM, bf16 (resident)
    # b2_ref: (1, D_out)       VMEM, f32  (resident)
    # o_ref:  (TILE_M, D_out)  VMEM, out dtype
    x = x_ref[...]
    h = jnp.dot(x, w1_ref[...], preferred_element_type=jnp.float32) + b1_ref[...]
    h = jnp.maximum(h, 0.0)                      # ReLU on the VPU, in f32
    y = jnp.dot(h.astype(w2_ref.dtype), w2_ref[...],
                preferred_element_type=jnp.float32) + b2_ref[...]
    o_ref[...] = y.astype(o_ref.dtype)


def prepare_fcnn_params(w1, b1, w2, b2, compute_dtype=jnp.bfloat16):
    """One-time conversion of PyTorch-layout params to kernel layout.

    (out, in) weights -> (in, out) in compute_dtype; biases -> (1, out) in f32.
    Doing this here keeps transposes/casts out of the per-call path.
    """
    w1_t = jnp.asarray(w1).T.astype(compute_dtype)
    w2_t = jnp.asarray(w2).T.astype(compute_dtype)
    b1_r = jnp.asarray(b1, jnp.float32).reshape(1, -1)
    b2_r = jnp.asarray(b2, jnp.float32).reshape(1, -1)
    return w1_t, b1_r, w2_t, b2_r


def fcnn_forward(x, params, *, tile_m=512):
    """x: (..., input_dim) -> (..., output_dim), matching FCNN.forward."""
    w1_t, b1_r, w2_t, b2_r = params
    compute_dtype = w1_t.dtype
    input_dim = x.shape[-1]
    hidden_dim = w1_t.shape[1]
    output_dim = w2_t.shape[1]
    lead_shape = x.shape[:-1]
    out_dtype = x.dtype

    x2 = x.reshape(-1, input_dim).astype(compute_dtype)
    M = x2.shape[0]

    # Sublane granularity: 16 rows for bf16, 8 for f32.
    sub = max(8, 32 // jnp.dtype(compute_dtype).itemsize)
    tm = tile_m if M >= tile_m else max(sub, _round_up(M, sub))
    tm = _round_up(tm, sub)
    M_pad = _round_up(M, tm)
    if M_pad != M:
        x2 = jnp.pad(x2, ((0, M_pad - M), (0, 0)))  # zero rows: harmless, sliced off below

    grid = (M_pad // tm,)

    cost = pl.CostEstimate(
        flops=2 * M_pad * (input_dim * hidden_dim + hidden_dim * output_dim),
        transcendentals=0,
        bytes_accessed=(x2.size * x2.dtype.itemsize
                        + M_pad * output_dim * jnp.dtype(out_dtype).itemsize
                        + w1_t.size * w1_t.dtype.itemsize
                        + w2_t.size * w2_t.dtype.itemsize
                        + b1_r.size * 4 + b2_r.size * 4),
    )

    out = pl.pallas_call(
        fcnn_kernel,
        out_shape=jax.ShapeDtypeStruct((M_pad, output_dim), out_dtype),
        grid_spec=pl.GridSpec(
            grid=grid,
            in_specs=[
                pl.BlockSpec((tm, input_dim), lambda i: (i, 0)),   # row tile of x
                pl.BlockSpec(w1_t.shape, lambda i: (0, 0)),        # resident
                pl.BlockSpec(b1_r.shape, lambda i: (0, 0)),        # resident
                pl.BlockSpec(w2_t.shape, lambda i: (0, 0)),        # resident
                pl.BlockSpec(b2_r.shape, lambda i: (0, 0)),        # resident
            ],
            out_specs=pl.BlockSpec((tm, output_dim), lambda i: (i, 0)),
        ),
        compiler_params=pltpu.CompilerParams(
            dimension_semantics=("parallel",)),  # rows independent -> v7x megacore
        cost_estimate=cost,
    )(x2, w1_t, b1_r, w2_t, b2_r)

    if M_pad != M:
        out = out[:M]
    return out.reshape(*lead_shape, output_dim)


def init_fcnn_params(key, input_dim, output_dim, dtype=jnp.float32):
    """Deterministic init mirroring nn.Linear shapes (W: (out, in), b: (out,))."""
    hidden_dim = 2 * input_dim
    k1, k2, k3, k4 = jax.random.split(key, 4)
    lim1 = 1.0 / jnp.sqrt(jnp.asarray(input_dim, dtype))
    lim2 = 1.0 / jnp.sqrt(jnp.asarray(hidden_dim, dtype))
    w1 = jax.random.uniform(k1, (hidden_dim, input_dim), dtype, -lim1, lim1)
    b1 = jax.random.uniform(k2, (hidden_dim,), dtype, -lim1, lim1)
    w2 = jax.random.uniform(k3, (output_dim, hidden_dim), dtype, -lim2, lim2)
    b2 = jax.random.uniform(k4, (output_dim,), dtype, -lim2, lim2)
    return w1, b1, w2, b2


if __name__ == "__main__":
    key = jax.random.PRNGKey(0)
    kx, kp = jax.random.split(key)

    batch, seq, input_dim, output_dim = 2, 8, 32, 16  # hidden_dim = 64
    x = jax.random.normal(kx, (batch, seq, input_dim), jnp.float32)
    w1, b1, w2, b2 = init_fcnn_params(kp, input_dim, output_dim)

    params = prepare_fcnn_params(w1, b1, w2, b2)  # one-time transpose + bf16 cast
    y = fcnn_forward(x, params)
    y = jax.block_until_ready(y)
    assert y.shape == (batch, seq, output_dim)
    assert y.dtype == x.dtype

    # Reference with matching bf16 operand precision and f32 accumulation.
    xb = x.astype(jnp.bfloat16).reshape(-1, input_dim)
    w1b, w2b = w1.astype(jnp.bfloat16), w2.astype(jnp.bfloat16)
    h_ref = jnp.maximum(
        jnp.dot(xb, w1b.T, preferred_element_type=jnp.float32) + b1, 0.0)
    y_ref = jnp.dot(h_ref.astype(jnp.bfloat16), w2b.T,
                    preferred_element_type=jnp.float32) + b2
    y_ref = y_ref.reshape(batch, seq, output_dim).astype(x.dtype)
    assert jnp.allclose(y, y_ref, atol=1e-4, rtol=1e-4), \
        float(jnp.max(jnp.abs(y - y_ref)))

    # Loose sanity check against the pure-f32 math (bf16 operands lose ~3 decimal digits).
    y_f32 = jnp.maximum(x @ w1.T + b1, 0.0) @ w2.T + b2
    assert jnp.allclose(y, y_f32, atol=5e-2, rtol=5e-2)

    print("KERNEL_OK")
</pallas_src>

<mosaic_0001>
module attributes {stable_mosaic.version = 11 : i64} {
  func.func @fcnn_kernel(%arg0: i32, %arg1: memref<16x32xbf16, #tpu.memory_space<vmem>>, %arg2: memref<32x64xbf16, #tpu.memory_space<vmem>>, %arg3: memref<1x64xf32, #tpu.memory_space<vmem>>, %arg4: memref<64x16xbf16, #tpu.memory_space<vmem>>, %arg5: memref<1x16xf32, #tpu.memory_space<vmem>>, %arg6: memref<16x16xf32, #tpu.memory_space<vmem>>) attributes {dimension_semantics = [#tpu.dimension_semantics<parallel>], iteration_bounds = array<i64: 1>, scalar_prefetch = 0 : i64, scratch_operands = 0 : i64, tpu.core_type = #tpu.core_type<tc>, window_params = [{transform_indices = @transform_0, window_bounds = array<i64: 16, 32>}, {pipeline_mode = #tpu.pipeline_mode<synchronous>, transform_indices = @transform_1, window_bounds = array<i64: 32, 64>}, {pipeline_mode = #tpu.pipeline_mode<synchronous>, transform_indices = @transform_2, window_bounds = array<i64: 1, 64>}, {pipeline_mode = #tpu.pipeline_mode<synchronous>, transform_indices = @transform_3, window_bounds = array<i64: 64, 16>}, {pipeline_mode = #tpu.pipeline_mode<synchronous>, transform_indices = @transform_4, window_bounds = array<i64: 1, 16>}, {transform_indices = @transform_5, window_bounds = array<i64: 16, 16>}]} {
    %c0 = arith.constant 0 : index
    %c0_0 = arith.constant 0 : index
    %0 = vector.load %arg1[%c0, %c0_0] : memref<16x32xbf16, #tpu.memory_space<vmem>>, vector<16x32xbf16>
    %c0_1 = arith.constant 0 : index
    %c0_2 = arith.constant 0 : index
    %1 = vector.load %arg2[%c0_1, %c0_2] : memref<32x64xbf16, #tpu.memory_space<vmem>>, vector<32x64xbf16>
    %cst = arith.constant dense<0.000000e+00> : vector<16x64xf32>
    %2 = tpu.matmul %0, %1, %cst {dimension_numbers = #tpu.dot_dimension_numbers<[1], [0], [0], [1], [0, 0, 1, 1], [], []>} : vector<16x32xbf16>, vector<32x64xbf16>, vector<16x64xf32> -> vector<16x64xf32>
    %c0_3 = arith.constant 0 : index
    %c0_4 = arith.constant 0 : index
    %3 = vector.load %arg3[%c0_3, %c0_4] : memref<1x64xf32, #tpu.memory_space<vmem>>, vector<1x64xf32>
    %4 = vector.broadcast %3 : vector<1x64xf32> to vector<16x64xf32>
    %5 = arith.addf %2, %4 : vector<16x64xf32>
    %cst_5 = arith.constant 0.000000e+00 : f32
    %6 = vector.broadcast %cst_5 : f32 to vector<16x64xf32>
    %7 = arith.maximumf %5, %6 : vector<16x64xf32>
    %8 = arith.truncf %7 : vector<16x64xf32> to vector<16x64xbf16>
    %c0_6 = arith.constant 0 : index
    %c0_7 = arith.constant 0 : index
    %9 = vector.load %arg4[%c0_6, %c0_7] : memref<64x16xbf16, #tpu.memory_space<vmem>>, vector<64x16xbf16>
    %cst_8 = arith.constant dense<0.000000e+00> : vector<16x16xf32>
    %10 = tpu.matmul %8, %9, %cst_8 {dimension_numbers = #tpu.dot_dimension_numbers<[1], [0], [0], [1], [0, 0, 1, 1], [], []>} : vector<16x64xbf16>, vector<64x16xbf16>, vector<16x16xf32> -> vector<16x16xf32>
    %c0_9 = arith.constant 0 : index
    %c0_10 = arith.constant 0 : index
    %11 = vector.load %arg5[%c0_9, %c0_10] : memref<1x16xf32, #tpu.memory_space<vmem>>, vector<1x16xf32>
    %12 = vector.broadcast %11 : vector<1x16xf32> to vector<16x16xf32>
    %13 = arith.addf %10, %12 : vector<16x16xf32>
    %c0_11 = arith.constant 0 : index
    %c0_12 = arith.constant 0 : index
    %14 = vector.load %arg6[%c0_11, %c0_12] : memref<16x16xf32, #tpu.memory_space<vmem>>, vector<16x16xf32>
    tpu.vector_store %arg6[%c0_11, %c0_12], %13 {strides = array<i32>} : memref<16x16xf32, #tpu.memory_space<vmem>>, vector<16x16xf32>,
    return
  }
  func.func @transform_0(%arg0: i32) -> (i32, i32) {
    %c0_i32 = arith.constant 0 : i32
    %c0_i32_0 = arith.constant 0 : i32
    return %arg0, %c0_i32 : i32, i32
  }
  func.func @transform_1(%arg0: i32) -> (i32, i32) {
    %c0_i32 = arith.constant 0 : i32
    %c0_i32_0 = arith.constant 0 : i32
    %c0_i32_1 = arith.constant 0 : i32
    return %c0_i32, %c0_i32_0 : i32, i32
  }
  func.func @transform_2(%arg0: i32) -> (i32, i32) {
    %c0_i32 = arith.constant 0 : i32
    %c0_i32_0 = arith.constant 0 : i32
    %c0_i32_1 = arith.constant 0 : i32
    return %c0_i32, %c0_i32_0 : i32, i32
  }
  func.func @transform_3(%arg0: i32) -> (i32, i32) {
    %c0_i32 = arith.constant 0 : i32
    %c0_i32_0 = arith.constant 0 : i32
    %c0_i32_1 = arith.constant 0 : i32
    return %c0_i32, %c0_i32_0 : i32, i32
  }
  func.func @transform_4(%arg0: i32) -> (i32, i32) {
    %c0_i32 = arith.constant 0 : i32
    %c0_i32_0 = arith.constant 0 : i32
    %c0_i32_1 = arith.constant 0 : i32
    return %c0_i32, %c0_i32_0 : i32, i32
  }
  func.func @transform_5(%arg0: i32) -> (i32, i32) {
    %c0_i32 = arith.constant 0 : i32
    %c0_i32_0 = arith.constant 0 : i32
    return %arg0, %c0_i32 : i32, i32
  }
}

</mosaic_0001>

<llo_original>
// kernel: tpu_custom_call.1
$region0: #{tpu_custom_call.1}
  #allocation0 [shape = 'u32[]', space=smem, size = 0x4, offset = 0x4, fixed_abs, tag = 'smem constant byte address 0x4 - core index']
  #allocation1 [shape = 'u32[144,128]{1,0:T(1,128)}', space=vmem, size = 0x12000, scoped, tag = 'internal scratch']
  %s0 = inlined_call_operand.vmem [shape: bf16[16,32], index: 0, kind: input, shape index: {}]
  %s1 = inlined_call_operand.vmem [shape: bf16[32,64], index: 1, kind: input, shape index: {}]
  %s2 = inlined_call_operand.vmem [shape: f32[1,64], index: 2, kind: input, shape index: {}]
  %s3 = inlined_call_operand.vmem [shape: bf16[64,16], index: 3, kind: input, shape index: {}]
  %s4 = inlined_call_operand.vmem [shape: f32[1,16], index: 4, kind: input, shape index: {}]
  %s5 = inlined_call_operand.hbm [shape: f32[16,16], index: 5, kind: output, shape index: {}]
  %s6 = sld [smem:[#allocation0]]
  $region30: #{tpu_custom_call.1} parent=0
    _
  %s8 = ssub.s32 1, %s6
  %s9 = scalar_select 0, %s8, %s6
  $region1: #{tpu_custom_call.1} parent=0
    #allocation2 [shape = 'u8[8192]{0}', space=vmem, size = 0x2000, scoped, tag = 'output window, operand 0, single buffered']
    #allocation3 [shape = 's32[1]{0}', space=sflag, size = 0x4, scoped, tag = 'scoped memory for tpu_custom_call.1']
    %10 = vsyncpa [#allocation3], 0
    // Predicated region
    $region2: #{tpu_custom_call.1} parent=1 // pred_check
      _
    $region3: #{tpu_custom_call.1} parent=1 // pred_check_branch
      %12 = sbr.rel (0) target = $region5
    $region4: #{tpu_custom_call.1} parent=1 // pred_region
      _
    $region5: #{tpu_custom_call.1} parent=1 // pred_fallthru
      _
    // Predicated region
    $region6: #{tpu_custom_call.1} parent=1 // pred_check
      _
    $region7: #{tpu_custom_call.1} parent=1 // pred_check_branch
      %14 = sbr.rel (0) target = $region9
    $region8: #{tpu_custom_call.1} parent=1 // pred_region
      _
    $region9: #{tpu_custom_call.1} parent=1 // pred_fallthru
      _
    // Predicated region
    $region10: #{tpu_custom_call.1} parent=1 // pred_check
      _
    $region11: #{tpu_custom_call.1} parent=1 // pred_check_branch
      %16 = sbr.rel (0) target = $region13
    $region12: #{tpu_custom_call.1} parent=1 // pred_region
      _
    $region13: #{tpu_custom_call.1} parent=1 // pred_fallthru
      _
    // Predicated region
    $region14: #{tpu_custom_call.1} parent=1 // pred_check
      _
    $region15: #{tpu_custom_call.1} parent=1 // pred_check_branch
      %18 = sbr.rel (0) target = $region17
    $region16: #{tpu_custom_call.1} parent=1 // pred_region
      _
    $region17: #{tpu_custom_call.1} parent=1 // pred_fallthru
      _
    // Predicated region
    $region18: #{tpu_custom_call.1} parent=1 // pred_check
      _
    $region19: #{tpu_custom_call.1} parent=1 // pred_check_branch
      %20 = sbr.rel (0) target = $region21
    $region20: #{tpu_custom_call.1} parent=1 // pred_region
      _
    $region21: #{tpu_custom_call.1} parent=1 // pred_fallthru
      _
    %v22 = vld [vmem:[%s0] sm:$0xf]
    %v23 = vld [vmem:[%s0 + $0x4] sm:$0xf]
    %v24 = vld [vmem:[%s1] sm:$0xf]
    %v25 = vld [vmem:[%s1 + $0x4] sm:$0xf]
    %v26 = vld [vmem:[%s1 + $0x8] sm:$0xf]
    %v27 = vld [vmem:[%s1 + $0xc] sm:$0xf]
    %v28 = vld [vmem:[%s2] sm:$0x1]
    %v30 = vlaneseq
    %v31 = vshrl.u32 %v30, 7
    %v32 = vsub.s32 0, %v31
    %v33 = vrot.slane %v28, %v32
    %v37 = vunpack.c.l.b16 %v22
    %v38 = vunpack.c.l.b16 %v23
    %v39 = vpack.c.b16 %v38, %v37
    %v44 = vunpack.c.l.b16 %v24
    %v45 = vunpack.c.l.b16 %v25
    %v46 = vunpack.c.l.b16 %v26
    %v47 = vunpack.c.l.b16 %v27
    %v48 = vpack.c.b16 %v45, %v44
    %v49 = vpack.c.b16 %v47, %v46
    %vm52 = vcmask 261120
    %v54 = vsel %vm52, %v39, 0
    %56 = vmatprep.subr.bf16.mxu0 0
    %57 = vmatpush1.bf16.msra.mxu0 %v48
    %58 = vmatprep.subr.bf16.mxu0 0
    %59 = vmatpush1.bf16.msra.mxu0 %v49
    %60 = vmatprep.subr.bf16.mxu0 0
    %61 = vmatpush1.bf16.msra.mxu0 0
    %62 = vmatprep.subr.bf16.mxu0 0
    %63 = vmatpush1.bf16.msra.mxu0 0
    %64 = vmatprep.subr.bf16.mxu0 0
    %65 = vmatpush1.bf16.msra.mxu0 0
    %66 = vmatprep.subr.bf16.mxu0 0
    %67 = vmatpush1.bf16.msra.mxu0 0
    %68 = vmatprep.subr.bf16.mxu0 0
    %69 = vmatpush1.bf16.msra.mxu0 0
    %70 = vmatprep.subr.bf16.mxu0 0
    %71 = vmatpush1.bf16.msra.mxu0 0
    %72 = vmatprep.subr.bf16.mxu0 0
    %73 = vmatpush1.bf16.msra.mxu0 0
    %74 = vmatprep.subr.bf16.mxu0 0
    %75 = vmatpush1.bf16.msra.mxu0 0
    %76 = vmatprep.subr.bf16.mxu0 0
    %77 = vmatpush1.bf16.msra.mxu0 0
    %78 = vmatprep.subr.bf16.mxu0 0
    %79 = vmatpush1.bf16.msra.mxu0 0
    %80 = vmatprep.subr.bf16.mxu0 0
    %81 = vmatpush1.bf16.msra.mxu0 0
    %82 = vmatprep.subr.bf16.mxu0 0
    %83 = vmatpush1.bf16.msra.mxu0 0
    %84 = vmatprep.subr.bf16.mxu0 0
    %85 = vmatpush1.bf16.msra.mxu0 0
    %86 = vmatprep.subr.bf16.mxu0 0
    %87 = vmatpush1.bf16.msra.mxu0 0
    %88 = vmatprep.mubr.bf16.mxu0 0
    %89 = vmatmul.mubr.bf16.gmra.mrb[0].mxu0 %v54
    %v90 = vpop.f32.mrb[0].mxu0
    %v91 = vadd.f32 %v33, %v90
    %v92 = vpop.f32.mrb[0].mxu0
    %v93 = vpop.f32.mrb[0].mxu0
    %v94 = vadd.f32 %v33, %v93
    %v95 = vpop.f32.mrb[0].mxu0
    %96 = vdwg.mxu0
    %v97 = vmax.f32 %v91, 0.0
    %v98 = vmax.f32 %v94, 0.0
    %v99 = vpack.c.bf16 %v98, %v97
    %v100 = vld [vmem:[%s3] sm:$0xf]
    %v101 = vld [vmem:[%s3 + $0x4] sm:$0xf]
    %v102 = vld [vmem:[%s3 + $0x8] sm:$0xf]
    %v103 = vld [vmem:[%s3 + $0xc] sm:$0xf]
    %v104 = vld [vmem:[%s3 + $0x10] sm:$0xf]
    %v105 = vld [vmem:[%s3 + $0x14] sm:$0xf]
    %v106 = vld [vmem:[%s3 + $0x18] sm:$0xf]
    %v107 = vld [vmem:[%s3 + $0x1c] sm:$0xf]
    %v108 = vld [vmem:[%s4] sm:$0x1]
    %v110 = vlaneseq
    %v111 = vshrl.u32 %v110, 7
    %v112 = vsub.s32 0, %v111
    %v113 = vrot.slane %v108, %v112
    %v123 = vunpack.c.l.b16 %v100
    %v124 = vunpack.c.l.b16 %v101
    %v125 = vunpack.c.l.b16 %v102
    %v126 = vunpack.c.l.b16 %v103
    %v127 = vunpack.c.l.b16 %v104
    %v128 = vunpack.c.l.b16 %v105
    %v129 = vunpack.c.l.b16 %v106
    %v130 = vunpack.c.l.b16 %v107
    %v131 = vpack.c.b16 %v124, %v123
    %v132 = vpack.c.b16 %v126, %v125
    %v133 = vpack.c.b16 %v128, %v127
    %v134 = vpack.c.b16 %v130, %v129
    %vm139 = vcmask 523264
    %v141 = vsel %vm139, %v99, 0
    %143 = vmatprep.subr.bf16.mxu0 0
    %144 = vmatpush1.bf16.msra.mxu0 %v131
    %145 = vmatprep.subr.bf16.mxu0 0
    %146 = vmatpush1.bf16.msra.mxu0 %v132
    %147 = vmatprep.subr.bf16.mxu0 0
    %148 = vmatpush1.bf16.msra.mxu0 %v133
    %149 = vmatprep.subr.bf16.mxu0 0
    %150 = vmatpush1.bf16.msra.mxu0 %v134
    %151 = vmatprep.subr.bf16.mxu0 0
    %152 = vmatpush1.bf16.msra.mxu0 0
    %153 = vmatprep.subr.bf16.mxu0 0
    %154 = vmatpush1.bf16.msra.mxu0 0
    %155 = vmatprep.subr.bf16.mxu0 0
    %156 = vmatpush1.bf16.msra.mxu0 0
    %157 = vmatprep.subr.bf16.mxu0 0
    %158 = vmatpush1.bf16.msra.mxu0 0
    %159 = vmatprep.subr.bf16.mxu0 0
    %160 = vmatpush1.bf16.msra.mxu0 0
    %161 = vmatprep.subr.bf16.mxu0 0
    %162 = vmatpush1.bf16.msra.mxu0 0
    %163 = vmatprep.subr.bf16.mxu0 0
    %164 = vmatpush1.bf16.msra.mxu0 0
    %165 = vmatprep.subr.bf16.mxu0 0
    %166 = vmatpush1.bf16.msra.mxu0 0
    %167 = vmatprep.subr.bf16.mxu0 0
    %168 = vmatpush1.bf16.msra.mxu0 0
    %169 = vmatprep.subr.bf16.mxu0 0
    %170 = vmatpush1.bf16.msra.mxu0 0
    %171 = vmatprep.subr.bf16.mxu0 0
    %172 = vmatpush1.bf16.msra.mxu0 0
    %173 = vmatprep.subr.bf16.mxu0 0
    %174 = vmatpush1.bf16.msra.mxu0 0
    %175 = vmatprep.mubr.bf16.mxu0 0
    %176 = vmatmul.mubr.bf16.gmra.mrb[0].mxu0 %v141
    %v177 = vpop.f32.mrb[0].mxu0
    %v178 = vadd.f32 %v113, %v177
    %v179 = vpop.f32.mrb[0].mxu0
    %v180 = vpop.f32.mrb[0].mxu0
    %v181 = vadd.f32 %v113, %v180
    %v182 = vpop.f32.mrb[0].mxu0
    %183 = vdwg.mxu0
    %vm184 = vcmask 130048
    %185 = vst.msk [vmem:[#allocation2] sm:$0xff] %vm184, %v178
    %186 = vst.msk [vmem:[#allocation2 + $0x8] sm:$0xff] %vm184, %v181
    // Predicated region
    $region22: #{tpu_custom_call.1} parent=1 // pred_check
      _
    $region23: #{tpu_custom_call.1} parent=1 // pred_check_branch
      %188 = sbr.rel (0) target = $region25
    $region24: #{tpu_custom_call.1} parent=1 // pred_region
      %s190 = ssub.s32 256, 256
      %191 = vsyncadd [#allocation3], %s190
      %s192 = sshll.u32 [#allocation2], 4
      %s193 = int_to_ptr.vmem [resolvable:$true] %s192
      %198 = dma.vmem_to_hbm [thread:$0]  %s193, 256, %s5, [#allocation3], 128, 128, 8
    $region25: #{tpu_custom_call.1} parent=1 // pred_fallthru
      _
    // Predicated region
    $region26: #{tpu_custom_call.1} parent=1 // pred_check
      _
    $region27: #{tpu_custom_call.1} parent=1 // pred_check_branch
      %200 = sbr.rel (0) target = $region29
    $region28: #{tpu_custom_call.1} parent=1 // pred_region
      %201 = dma.done [#allocation3], 256
    $region29: #{tpu_custom_call.1} parent=1 // pred_fallthru
      _
    %202 = vsyncpa [#allocation3], 1

</llo_original>
